<compile_context>
chip_gen: v6e
topology: v6e:2x2x1
jax: 0.10.0
libtpu: 0.0.40
codegen_flags: <defaults>
</compile_context>

<pallas_src>
import functools

import numpy as np
import jax
import jax.numpy as jnp
from jax.experimental import pallas as pl
from jax.experimental.pallas import tpu as pltpu


# ----------------------------------------------------------------------------
# chip detection helpers (Python-level, used only for tiling decisions)
# ----------------------------------------------------------------------------
def _tpu_generation():
    try:
        kind = jax.devices()[0].device_kind.lower()
    except Exception:
        return 6
    for g in (7, 6, 5, 4, 3, 2):
        if ("v%d" % g) in kind:
            return g
    return 6


def _compute_dtype_for(dtype):
    # bf16 math only where the VPU runs bf16 natively (v6e / v7x); otherwise f32.
    if jnp.dtype(dtype) == jnp.dtype(jnp.bfloat16) and _tpu_generation() >= 6:
        return jnp.bfloat16
    return jnp.float32


# ----------------------------------------------------------------------------
# kernel
# ----------------------------------------------------------------------------
def _q_relu_kernel(inv_a_ref, scale_ref, coef_ref, x_ref, o_ref, *, compute_dtype):
    # inv_a_ref : (1,) f32 SMEM -- 1 / softplus(a)
    # scale_ref : (K,) f32 SMEM -- n_lv_i - 1
    # coef_ref  : (K,) f32 SMEM -- softplus(c) * gumbel_mask_i / (n_lv_i - 1)
    # x_ref/o_ref: (blk_m, 128) VMEM tiles in the caller's native dtype.
    cd = compute_dtype
    x = x_ref[...].astype(cd)
    # relu + hardtanh(x / a, 0, 1): softplus(a) > 0, so the relu is absorbed by
    # the lower clip bound and the divide becomes a precomputed scalar multiply.
    x = jnp.clip(x * inv_a_ref[0].astype(cd), 0.0, 1.0)
    # Mixture over candidate bit-widths; per-level scalars hoisted to SMEM,
    # static K -> unrolled.
    acc = jnp.round(x * scale_ref[0].astype(cd)) * coef_ref[0].astype(cd)
    for i in range(1, scale_ref.shape[0]):
        acc = acc + jnp.round(x * scale_ref[i].astype(cd)) * coef_ref[i].astype(cd)
    o_ref[...] = acc.astype(o_ref.dtype)


# Pure-jnp elementwise version (tail handling + reference); mirrors kernel math.
def _q_relu_elem(x_flat, inv_a, scale, coef, compute_dtype):
    cd = compute_dtype
    xr = jnp.clip(x_flat.astype(cd) * inv_a.astype(cd), 0.0, 1.0)
    out = jnp.round(xr * scale[0].astype(cd)) * coef[0].astype(cd)
    for i in range(1, scale.shape[0]):
        out = out + jnp.round(xr * scale[i].astype(cd)) * coef[i].astype(cd)
    return out


def _x_block_spec(blk_m, lanes, triple_buffer):
    idx = lambda i: (i, 0)
    if triple_buffer:
        try:
            return pl.BlockSpec((blk_m, lanes), idx, pipeline_mode=pl.Buffered(3))
        except Exception:
            pass
    return pl.BlockSpec((blk_m, lanes), idx)


# ----------------------------------------------------------------------------
# wrapper
# ----------------------------------------------------------------------------
def q_relu_forward(x, a_param, c_param, n_lvs, softmask):
    """Q_ReLU hot path (streaming VPU kernel). x: any-shape float array."""
    orig_shape = x.shape
    dtype = x.dtype
    total = int(np.prod(orig_shape))
    cd = _compute_dtype_for(dtype)

    # Parameter glue (scalar math) stays in plain JAX; hoisted out of the kernel.
    a = jax.nn.softplus(jnp.asarray(a_param, jnp.float32)).reshape(-1)[0]
    c = jax.nn.softplus(jnp.asarray(c_param, jnp.float32)).reshape(-1)[0]
    nlv = jnp.asarray(n_lvs, jnp.float32).reshape(-1)
    mask = jnp.asarray(softmask, jnp.float32).reshape(-1)
    inv_a = (1.0 / a).reshape(1)
    scale = nlv - 1.0
    coef = c * mask / scale
    n_levels = int(nlv.shape[0])

    lanes = 128
    itemsize = jnp.dtype(dtype).itemsize
    align = max(8, 32 // itemsize)          # sublane align: f32 -> 8, bf16 -> 16
    chunk = lanes * align

    flat = x.reshape(-1)                     # free (row-major bitcast)
    main = (total // chunk) * chunk          # kernel-handled, fully aligned prefix
    tail = total - main                      # < chunk elements, handled in jnp

    if main == 0:
        out = _q_relu_elem(flat, inv_a[0], scale, coef, cd).astype(dtype)
        return out.reshape(orig_shape)

    rows = main // lanes                     # multiple of `align`
    gen = _tpu_generation()
    n_cores = 2 if gen >= 7 else 1

    # Block sizing: ~4 MiB/buffer on v7x, ~2 MiB on v5e/v6e, but always enough
    # grid steps (>= 4, even on v7x) so the pipeline actually overlaps.
    blk_bytes = (4 if gen >= 7 else 2) * 1024 * 1024
    blk_cap = max(align, (blk_bytes // (lanes * itemsize)) // align * align)
    target_steps = max(4, 2 * n_cores)
    blk_m = -(-rows // target_steps)
    blk_m = -(-blk_m // align) * align
    blk_m = max(align, min(blk_m, blk_cap))
    grid_m = -(-rows // blk_m)
    if n_cores == 2 and grid_m > 1 and grid_m % 2 == 1:
        # v7x megacore: make the step count even so neither TC idles on a tail.
        bm = -(-rows // (grid_m + 1))
        bm = -(-bm // align) * align
        if align <= bm < blk_m:
            blk_m = bm
            grid_m = -(-rows // blk_m)

    if tail == 0:
        x2d = flat.reshape(rows, lanes)      # zero-copy
    else:
        # TODO(synk): fully zero-copy ragged handling would need manual DMA of
        # the unaligned tail; the prefix slice below is one bounded extra copy.
        x2d = flat[:main].reshape(rows, lanes)

    triple = (gen <= 5) and (grid_m >= 3) and (rows % blk_m == 0)
    smem = pl.BlockSpec(memory_space=pltpu.MemorySpace.SMEM)
    kernel = functools.partial(_q_relu_kernel, compute_dtype=cd)

    out2d = pl.pallas_call(
        kernel,
        out_shape=jax.ShapeDtypeStruct((rows, lanes), dtype),
        grid=(grid_m,),
        in_specs=[smem, smem, smem, _x_block_spec(blk_m, lanes, triple)],
        out_specs=pl.BlockSpec((blk_m, lanes), lambda i: (i, 0)),
        compiler_params=pltpu.CompilerParams(
            dimension_semantics=("parallel",),
            vmem_limit_bytes=(48 if gen >= 7 else 64) * 1024 * 1024),
        cost_estimate=pl.CostEstimate(
            flops=(3 + 4 * n_levels) * main,
            transcendentals=0,
            bytes_accessed=2 * main * itemsize),
    )(inv_a, scale, coef, x2d)

    main_out = out2d.reshape(-1)
    if tail == 0:
        return main_out.reshape(orig_shape)
    tail_out = _q_relu_elem(flat[main:], inv_a[0], scale, coef, cd).astype(dtype)
    return jnp.concatenate([main_out, tail_out]).reshape(orig_shape)


def gumbel_softmax(key, logits, tau=1.0):
    # F.gumbel_softmax(theta, tau=1, hard=False), deterministic via PRNGKey.
    # TODO(synk): sampling stays in JAX glue (tiny, per-module, not per-element).
    u = jax.random.uniform(key, logits.shape, minval=1e-10, maxval=1.0)
    g = -jnp.log(-jnp.log(u))
    return jax.nn.softmax((logits + g) / tau)


# ----------------------------------------------------------------------------
# self-test
# ----------------------------------------------------------------------------
if __name__ == "__main__":
    key = jax.random.PRNGKey(0)
    kg, kx1, kx2, kx3, kx4 = jax.random.split(key, 5)

    # Deterministic "module init" mirroring Q_ReLU.initialize(n_lvs, offset, diff)
    n_lvs = [4.0, 8.0, 16.0]                 # candidate quantization levels
    offset, diff = 3.0, 0.5
    a_init = float(np.log(np.exp(offset + diff) - 1.0))
    a_param = jnp.full((1,), a_init, jnp.float32)
    c_param = jnp.full((1,), a_init, jnp.float32)
    theta_x = jnp.full((len(n_lvs),), 1.0 / len(n_lvs), jnp.float32)
    softmask = gumbel_softmax(kg, theta_x, tau=1.0)

    def reference(x):
        cd = _compute_dtype_for(x.dtype)
        a = jax.nn.softplus(a_param)[0]
        c = jax.nn.softplus(c_param)[0]
        nlv = jnp.asarray(n_lvs, jnp.float32)
        inv_a = 1.0 / a
        scale = nlv - 1.0
        coef = c * jnp.asarray(softmask, jnp.float32) / scale
        out = _q_relu_elem(x.reshape(-1), inv_a, scale, coef, cd)
        return out.astype(x.dtype).reshape(x.shape)

    def check(x, rtol, atol):
        out = q_relu_forward(x, a_param, c_param, n_lvs, softmask)
        jax.block_until_ready(out)
        ref = reference(x)
        np.testing.assert_allclose(np.asarray(out.astype(jnp.float32)),
                                   np.asarray(ref.astype(jnp.float32)),
                                   rtol=rtol, atol=atol)

    # 1) NCHW conv activation, f32, lane-aligned flat size (zero-copy path)
    check(jax.random.normal(kx1, (2, 4, 16, 16), jnp.float32) * 2.0, 1e-5, 1e-6)

    # 2) ragged flat size (exercises the prefix + jnp-tail path)
    check(jax.random.normal(kx2, (3, 5, 7, 11), jnp.float32), 1e-5, 1e-6)

    # 3) bf16 I/O (bf16 compute on v6e/v7x, f32 compute on older chips)
    check((jax.random.normal(kx3, (2, 8, 16, 16), jnp.float32) * 2.0)
          .astype(jnp.bfloat16), 1e-2, 1e-2)

    # 4) multi-step grid with a ragged last block (rows=100, blk_m multiple of 8)
    check(jax.random.normal(kx4, (4, 10, 10, 32), jnp.float32) * 2.0, 1e-5, 1e-6)

    print("KERNEL_OK")
</pallas_src>

<mosaic_0001>
module attributes {stable_mosaic.version = 11 : i64} {
  func.func @_q_relu_kernel(%arg0: i32, %arg1: memref<1xf32, #tpu.memory_space<smem>>, %arg2: memref<3xf32, #tpu.memory_space<smem>>, %arg3: memref<3xf32, #tpu.memory_space<smem>>, %arg4: memref<8x128xf32, #tpu.memory_space<vmem>>, %arg5: memref<8x128xf32, #tpu.memory_space<vmem>>) attributes {dimension_semantics = [#tpu.dimension_semantics<parallel>], iteration_bounds = array<i64: 2>, scalar_prefetch = 0 : i64, scratch_operands = 0 : i64, tpu.core_type = #tpu.core_type<tc>, window_params = [{transform_indices = @transform_0, window_bounds = array<i64: 1>}, {transform_indices = @transform_1, window_bounds = array<i64: 3>}, {transform_indices = @transform_2, window_bounds = array<i64: 3>}, {transform_indices = @transform_3, window_bounds = array<i64: 8, 128>}, {transform_indices = @transform_4, window_bounds = array<i64: 8, 128>}]} {
    %c0 = arith.constant 0 : index
    %c0_0 = arith.constant 0 : index
    %0 = vector.load %arg4[%c0, %c0_0] : memref<8x128xf32, #tpu.memory_space<vmem>>, vector<8x128xf32>
    %c0_1 = arith.constant 0 : index
    %1 = memref.load %arg1[%c0_1] : memref<1xf32, #tpu.memory_space<smem>>
    %2 = vector.broadcast %1 : f32 to vector<8x128xf32>
    %3 = arith.mulf %0, %2 : vector<8x128xf32>
    %cst = arith.constant 0.000000e+00 : f32
    %cst_2 = arith.constant 1.000000e+00 : f32
    %4 = vector.broadcast %cst : f32 to vector<8x128xf32>
    %5 = arith.maximumf %4, %3 : vector<8x128xf32>
    %6 = vector.broadcast %cst_2 : f32 to vector<8x128xf32>
    %7 = arith.minimumf %6, %5 : vector<8x128xf32>
    %c0_3 = arith.constant 0 : index
    %8 = memref.load %arg2[%c0_3] : memref<3xf32, #tpu.memory_space<smem>>
    %9 = vector.broadcast %8 : f32 to vector<8x128xf32>
    %10 = arith.mulf %7, %9 : vector<8x128xf32>
    %11 = math.roundeven %10 : vector<8x128xf32>
    %c0_4 = arith.constant 0 : index
    %12 = memref.load %arg3[%c0_4] : memref<3xf32, #tpu.memory_space<smem>>
    %13 = vector.broadcast %12 : f32 to vector<8x128xf32>
    %14 = arith.mulf %11, %13 : vector<8x128xf32>
    %c1 = arith.constant 1 : index
    %15 = memref.load %arg2[%c1] : memref<3xf32, #tpu.memory_space<smem>>
    %16 = vector.broadcast %15 : f32 to vector<8x128xf32>
    %17 = arith.mulf %7, %16 : vector<8x128xf32>
    %18 = math.roundeven %17 : vector<8x128xf32>
    %c1_5 = arith.constant 1 : index
    %19 = memref.load %arg3[%c1_5] : memref<3xf32, #tpu.memory_space<smem>>
    %20 = vector.broadcast %19 : f32 to vector<8x128xf32>
    %21 = arith.mulf %18, %20 : vector<8x128xf32>
    %22 = arith.addf %14, %21 : vector<8x128xf32>
    %c2 = arith.constant 2 : index
    %23 = memref.load %arg2[%c2] : memref<3xf32, #tpu.memory_space<smem>>
    %24 = vector.broadcast %23 : f32 to vector<8x128xf32>
    %25 = arith.mulf %7, %24 : vector<8x128xf32>
    %26 = math.roundeven %25 : vector<8x128xf32>
    %c2_6 = arith.constant 2 : index
    %27 = memref.load %arg3[%c2_6] : memref<3xf32, #tpu.memory_space<smem>>
    %28 = vector.broadcast %27 : f32 to vector<8x128xf32>
    %29 = arith.mulf %26, %28 : vector<8x128xf32>
    %30 = arith.addf %22, %29 : vector<8x128xf32>
    %c0_7 = arith.constant 0 : index
    %c0_8 = arith.constant 0 : index
    %31 = vector.load %arg5[%c0_7, %c0_8] : memref<8x128xf32, #tpu.memory_space<vmem>>, vector<8x128xf32>
    tpu.vector_store %arg5[%c0_7, %c0_8], %30 {strides = array<i32>} : memref<8x128xf32, #tpu.memory_space<vmem>>, vector<8x128xf32>,
    return
  }
  func.func @transform_0(%arg0: i32) -> i32 {
    %c0_i32 = arith.constant 0 : i32
    %c0_i32_0 = arith.constant 0 : i32
    return %c0_i32 : i32
  }
  func.func @transform_1(%arg0: i32) -> i32 {
    %c0_i32 = arith.constant 0 : i32
    %c0_i32_0 = arith.constant 0 : i32
    return %c0_i32 : i32
  }
  func.func @transform_2(%arg0: i32) -> i32 {
    %c0_i32 = arith.constant 0 : i32
    %c0_i32_0 = arith.constant 0 : i32
    return %c0_i32 : i32
  }
  func.func @transform_3(%arg0: i32) -> (i32, i32) {
    %c0_i32 = arith.constant 0 : i32
    %c0_i32_0 = arith.constant 0 : i32
    return %arg0, %c0_i32 : i32, i32
  }
  func.func @transform_4(%arg0: i32) -> (i32, i32) {
    %c0_i32 = arith.constant 0 : i32
    %c0_i32_0 = arith.constant 0 : i32
    return %arg0, %c0_i32 : i32, i32
  }
}

</mosaic_0001>

<llo_original>
// kernel: tpu_custom_call.1
$region0: #{tpu_custom_call.1}
  #allocation0 [shape = 'u32[]', space=smem, size = 0x4, offset = 0x4, fixed_abs, tag = 'smem constant byte address 0x4 - core index']
  #allocation1 [shape = 'u32[144,128]{1,0:T(1,128)}', space=vmem, size = 0x12000, scoped, tag = 'internal scratch']
  #allocation2 [shape = 'f32[1]{0:T(128)S(6)}', space=smem, size = 0x200, scoped, tag = 'scoped memory for tpu_custom_call.1']
  %s0 = inlined_call_operand.<no memory space> [shape: f32[1], index: 0, kind: input, shape index: {}]
  %s1 = inlined_call_operand.vmem [shape: f32[3], index: 1, kind: input, shape index: {}]
  %s2 = inlined_call_operand.vmem [shape: f32[3], index: 2, kind: input, shape index: {}]
  %s3 = inlined_call_operand.hbm [shape: f32[16,128], index: 3, kind: input, shape index: {}]
  %s4 = inlined_call_operand.hbm [shape: f32[16,128], index: 4, kind: output, shape index: {}]
  %s5 = sld [smem:[#allocation0]]
  $region61: #{tpu_custom_call.1} parent=0
    _
  %s7 = ssub.s32 1, %s5
  %s8 = scalar_select 0, %s7, %s5
  %9 = sst [smem:[#allocation2]] %s0
  $region1: #{tpu_custom_call.1} parent=0
    #allocation3 [shape = 'u8[512]{0}', space=smem, size = 0x200, scoped, tag = 'input window, operand 1, single buffered']
    #allocation4 [shape = 's32[2]{0}', space=sflag, size = 0x8, scoped, tag = 'scoped memory for tpu_custom_call.1']
    #allocation5 [shape = 's32[2]{0}', space=sflag, size = 0x8, scoped, tag = 'scoped memory for tpu_custom_call.1']
    #allocation6 [shape = 's32[2]{0}', space=sflag, size = 0x8, scoped, tag = 'scoped memory for tpu_custom_call.1']
    #allocation7 [shape = 'u8[512]{0}', space=smem, size = 0x200, scoped, tag = 'input window, operand 2, single buffered']
    #allocation8 [shape = 's32[1]{0}', space=sflag, size = 0x4, scoped, tag = 'scoped memory for tpu_custom_call.1']
    #allocation9 [shape = 'u8[8192]{0}', space=vmem, size = 0x2000, scoped, tag = 'input window, operand 3']
    #allocation10 [shape = 'u8[8192]{0}', space=vmem, size = 0x2000, scoped, tag = 'output window, operand 0']
    %10 = vsyncpa [#allocation6], 0
    %11 = vsyncpa [#allocation8], 0
    %12 = vsyncpa [#allocation4], 0
    %s13 = scalar_lea.sflag [#allocation4], 1
    %14 = vsyncpa %s13, 0
    %15 = vsyncpa [#allocation5], 0
    %s16 = scalar_lea.sflag [#allocation5], 1
    %17 = vsyncpa %s16, 0
    loop: start=0, step=1, limit=4
    $region2: #{tpu_custom_call.1} parent=1 // loop_pre_header
      _
    $region3: #{tpu_custom_call.1} parent=1 // loop_header
      %s19 = sphi 0, %s23
      %p20 = scmp.ge.s32.totalorder %s19, 4
      %s27 = sphi 0, %s27
      %s29 = sphi 0, %s27
      %s30 = sphi 0, %s29
      %s44 = sphi 0, %s30
      %s48 = sphi 0, %s48
      %s50 = sphi 0, %s48
      %s51 = sphi 0, %s50
      %s65 = sphi 0, %s51
      %s69 = sphi 0, %s69
      %s71 = sphi 0, %s69
      %s72 = sphi 0, %s71
      %s86 = sphi 0, %s72
      %s92 = sphi 0, %s94
      %s95 = sphi 0, %s92
      %s96 = sphi 0, %s95
      %s112 = sphi 0, %s96
      %s118 = sphi 0, %s120
      %s121 = sphi 0, %s118
      %s122 = sphi 0, %s121
      %s138 = sphi 0, %s122
    $region4: #{tpu_custom_call.1} parent=1 // loop_header_branch
      %22 = sbr.rel (%p20) target = $region8
    $region5: #{tpu_custom_call.1} parent=1 // loop_body
      %s24 = ssub.s32 %s19, 1
      %s25 = ssub.s32 %s19, 2
      %s26 = sadd.s32 %s19, 1
      %s28 = sadd.s32 %s27, 1
      %p31 = scmp.eq.s32.totalorder %s19, 1
      %p32 = scmp.ne.s32.totalorder %s27, %s29
      %p33 = scmp.eq.s32.totalorder %s19, 0
      %p34 = por %p32, %p33
      %p35 = scmp.ne.s32.totalorder %s27, %s29
      %p36 = scmp.eq.s32.totalorder %s24, 1
      %p37 = por %p35, %p36
      %p38 = scmp.ne.s32.totalorder %s29, %s30
      %p39 = scmp.eq.s32.totalorder %s24, 0
      %p40 = por %p38, %p39
      %p41 = scmp.ne.s32.totalorder %s29, %s30
      %p42 = scmp.eq.s32.totalorder %s25, 1
      %p43 = por %p41, %p42
      %p45 = scmp.ne.s32.totalorder %s30, %s44
      %p46 = scmp.eq.s32.totalorder %s25, 0
      %p47 = por %p45, %p46
      %s49 = sadd.s32 %s48, 1
      %p52 = scmp.eq.s32.totalorder %s19, 1
      %p53 = scmp.ne.s32.totalorder %s48, %s50
      %p54 = scmp.eq.s32.totalorder %s19, 0
      %p55 = por %p53, %p54
      %p56 = scmp.ne.s32.totalorder %s48, %s50
      %p57 = scmp.eq.s32.totalorder %s24, 1
      %p58 = por %p56, %p57
      %p59 = scmp.ne.s32.totalorder %s50, %s51
      %p60 = scmp.eq.s32.totalorder %s24, 0
      %p61 = por %p59, %p60
      %p62 = scmp.ne.s32.totalorder %s50, %s51
      %p63 = scmp.eq.s32.totalorder %s25, 1
      %p64 = por %p62, %p63
      %p66 = scmp.ne.s32.totalorder %s51, %s65
      %p67 = scmp.eq.s32.totalorder %s25, 0
      %p68 = por %p66, %p67
      %s70 = sadd.s32 %s69, 1
      %p73 = scmp.eq.s32.totalorder %s19, 1
      %p74 = scmp.ne.s32.totalorder %s69, %s71
      %p75 = scmp.eq.s32.totalorder %s19, 0
      %p76 = por %p74, %p75
      %p77 = scmp.ne.s32.totalorder %s69, %s71
      %p78 = scmp.eq.s32.totalorder %s24, 1
      %p79 = por %p77, %p78
      %p80 = scmp.ne.s32.totalorder %s71, %s72
      %p81 = scmp.eq.s32.totalorder %s24, 0
      %p82 = por %p80, %p81
      %p83 = scmp.ne.s32.totalorder %s71, %s72
      %p84 = scmp.eq.s32.totalorder %s25, 1
      %p85 = por %p83, %p84
      %p87 = scmp.ne.s32.totalorder %s72, %s86
      %p88 = scmp.eq.s32.totalorder %s25, 0
      %p89 = por %p87, %p88
      %s90 = ssub.s32 %s19, %s26
      %p91 = scmp.eq.s32.totalorder %s90, 0
      %s93 = sadd.s32 %s92, 1
      %s94 = scalar_select %p91, %s92, %s93
      %p97 = pneg %p91
      %p98 = scmp.eq.s32.totalorder %s19, 1
      %p99 = por %p97, %p98
      %p100 = scmp.ne.s32.totalorder %s92, %s95
      %p101 = scmp.eq.s32.totalorder %s19, 0
      %p102 = por %p100, %p101
      %p103 = scmp.ne.s32.totalorder %s92, %s95
      %p104 = scmp.eq.s32.totalorder %s24, 1
      %p105 = por %p103, %p104
      %p106 = scmp.ne.s32.totalorder %s95, %s96
      %p107 = scmp.eq.s32.totalorder %s24, 0
      %p108 = por %p106, %p107
      %p109 = scmp.ne.s32.totalorder %s95, %s96
      %p110 = scmp.eq.s32.totalorder %s25, 1
      %p111 = por %p109, %p110
      %p113 = scmp.ne.s32.totalorder %s96, %s112
      %p114 = scmp.eq.s32.totalorder %s25, 0
      %p115 = por %p113, %p114
      %s116 = ssub.s32 %s19, %s26
      %p117 = scmp.eq.s32.totalorder %s116, 0
      %s119 = sadd.s32 %s118, 1
      %s120 = scalar_select %p117, %s118, %s119
      %p123 = pneg %p117
      %p124 = scmp.eq.s32.totalorder %s19, 1
      %p125 = por %p123, %p124
      %p126 = scmp.ne.s32.totalorder %s118, %s121
      %p127 = scmp.eq.s32.totalorder %s19, 0
      %p128 = por %p126, %p127
      %p129 = scmp.ne.s32.totalorder %s118, %s121
      %p130 = scmp.eq.s32.totalorder %s24, 1
      %p131 = por %p129, %p130
      %p132 = scmp.ne.s32.totalorder %s121, %s122
      %p133 = scmp.eq.s32.totalorder %s24, 0
      %p134 = por %p132, %p133
      %p135 = scmp.ne.s32.totalorder %s121, %s122
      %p136 = scmp.eq.s32.totalorder %s25, 1
      %p137 = por %p135, %p136
      %p139 = scmp.ne.s32.totalorder %s122, %s138
      %p140 = scmp.eq.s32.totalorder %s25, 0
      %p141 = por %p139, %p140
      %p142 = scmp.le.s32.totalorder 1, %s19
      %p143 = scmp.lt.s32.totalorder %s19, 3
      %p144 = pnand %p142, %p143
      %p145 = pneg %p144
      // Predicated region
      $region9: #{tpu_custom_call.1} parent=5 // pred_check
        _
      $region10: #{tpu_custom_call.1} parent=5 // pred_check_branch
        %147 = sbr.rel (%p144) target = $region12
      $region11: #{tpu_custom_call.1} parent=5 // pred_region
        %s148 = ssub.s32 %s19, 1
        // Predicated region
        $region13: #{tpu_custom_call.1} parent=11 // pred_check
          %p149 = pneg %p40
        $region14: #{tpu_custom_call.1} parent=11 // pred_check_branch
          %151 = sbr.rel (%p149) target = $region16
        $region15: #{tpu_custom_call.1} parent=11 // pred_region
          _
        $region16: #{tpu_custom_call.1} parent=11 // pred_fallthru
          _
        // Predicated region
        $region17: #{tpu_custom_call.1} parent=11 // pred_check
          %p152 = pneg %p61
        $region18: #{tpu_custom_call.1} parent=11 // pred_check_branch
          %154 = sbr.rel (%p152) target = $region20
        $region19: #{tpu_custom_call.1} parent=11 // pred_region
          %s156 = ssub.s32 16, 16
          %157 = vsyncadd [#allocation6], %s156
          %s159 = sshll.u32 %s1, 4
          %s160 = int_to_ptr.vmem [resolvable:$true] %s159
          %162 = dma.vmem_to_smem %s160, 16, [#allocation3], [#allocation6]
        $region20: #{tpu_custom_call.1} parent=11 // pred_fallthru
          _
        // Predicated region
        $region21: #{tpu_custom_call.1} parent=11 // pred_check
          %p163 = pneg %p82
        $region22: #{tpu_custom_call.1} parent=11 // pred_check_branch
          %165 = sbr.rel (%p163) target = $region24
        $region23: #{tpu_custom_call.1} parent=11 // pred_region
          %s167 = ssub.s32 16, 16
          %168 = vsyncadd [#allocation8], %s167
          %s170 = sshll.u32 %s2, 4
          %s171 = int_to_ptr.vmem [resolvable:$true] %s170
          %173 = dma.vmem_to_smem %s171, 16, [#allocation7], [#allocation8]
        $region24: #{tpu_custom_call.1} parent=11 // pred_fallthru
          _
      $region12: #{tpu_custom_call.1} parent=5 // pred_fallthru
        _
      %p174 = scmp.lt.s32.totalorder %s19, 2
      // Predicated region
      $region25: #{tpu_custom_call.1} parent=5 // pred_check
        %p175 = pneg %p174
      $region26: #{tpu_custom_call.1} parent=5 // pred_check_branch
        %177 = sbr.rel (%p175) target = $region28
      $region27: #{tpu_custom_call.1} parent=5 // pred_region
        // Predicated region
        $region29: #{tpu_custom_call.1} parent=27 // pred_check
          %p178 = pneg %p102
        $region30: #{tpu_custom_call.1} parent=27 // pred_check_branch
          %180 = sbr.rel (%p178) target = $region32
        $region31: #{tpu_custom_call.1} parent=27 // pred_region
          %s181 = sand.u32 %s92, 1
          %s182 = scalar_lea.sflag [#allocation4], %s181
          %s183 = sand.u32 %s92, 1
          %s184 = smul.addr %s183, 8
          %s185 = scalar_lea.vmem [#allocation9], %s184
          %s187 = ssub.s32 128, 128
          %188 = vsyncadd %s182, %s187
          %s189 = smul.addr %s19, 128
          %s190 = scalar_lea.hbm %s3, %s189
          %s192 = sshll.u32 %s185, 4
          %s193 = int_to_ptr.vmem [resolvable:$true] %s192
          %195 = dma.hbm_to_vmem [thread:$0]  %s190, 128, %s193, %s182
        $region32: #{tpu_custom_call.1} parent=27 // pred_fallthru
          _
      $region28: #{tpu_custom_call.1} parent=5 // pred_fallthru
        _
      %p196 = scmp.le.s32.totalorder 1, %s19
      %p197 = scmp.lt.s32.totalorder %s19, 3
      %p198 = pnand %p196, %p197
      %p199 = pneg %p198
      // Predicated region
      $region33: #{tpu_custom_call.1} parent=5 // pred_check
        _
      $region34: #{tpu_custom_call.1} parent=5 // pred_check_branch
        %201 = sbr.rel (%p198) target = $region36
      $region35: #{tpu_custom_call.1} parent=5 // pred_region
        %s202 = ssub.s32 %s19, 1
        // Predicated region
        $region37: #{tpu_custom_call.1} parent=35 // pred_check
          %p203 = pneg %p61
        $region38: #{tpu_custom_call.1} parent=35 // pred_check_branch
          %205 = sbr.rel (%p203) target = $region40
        $region39: #{tpu_custom_call.1} parent=35 // pred_region
          %206 = dma.done [#allocation6], 16
        $region40: #{tpu_custom_call.1} parent=35 // pred_fallthru
          _
        // Predicated region
        $region41: #{tpu_custom_call.1} parent=35 // pred_check
          %p207 = pneg %p82
        $region42: #{tpu_custom_call.1} parent=35 // pred_check_branch
          %209 = sbr.rel (%p207) target = $region44
        $region43: #{tpu_custom_call.1} parent=35 // pred_region
          %210 = dma.done [#allocation8], 16
        $region44: #{tpu_custom_call.1} parent=35 // pred_fallthru
          _
        %s211 = sand.u32 %s95, 1
        %s212 = scalar_lea.sflag [#allocation4], %s211
        %s213 = sand.u32 %s95, 1
        %s214 = smul.addr %s213, 8
        %s215 = scalar_lea.vmem [#allocation9], %s214
        // Predicated region
        $region45: #{tpu_custom_call.1} parent=35 // pred_check
          %p216 = pneg %p108
        $region46: #{tpu_custom_call.1} parent=35 // pred_check_branch
          %218 = sbr.rel (%p216) target = $region48
        $region47: #{tpu_custom_call.1} parent=35 // pred_region
          %219 = dma.done %s212, 128
        $region48: #{tpu_custom_call.1} parent=35 // pred_fallthru
          _
        %220 = sfence
        %p221 = pneg %p40
        %p222 = pneg %p37
        %p223 = pneg %p61
        %p224 = pneg %p58
        %p225 = pneg %p82
        %p226 = pneg %p79
        %s227 = sand.u32 %s95, 1
        %s228 = scalar_lea.sflag [#allocation4], %s227
        %s229 = sand.u32 %s95, 1
        %s230 = smul.addr %s229, 8
        %s231 = scalar_lea.vmem [#allocation9], %s230
        %p232 = pneg %p108
        %p233 = pneg %p105
        %p234 = pneg %p134
        %p235 = pneg %p131
        %s236 = sand.u32 %s121, 1
        %s237 = scalar_lea.sflag [#allocation5], %s236
        %s238 = sand.u32 %s121, 1
        %s239 = smul.addr %s238, 8
        %s240 = scalar_lea.vmem [#allocation10], %s239
        %v241 = vld [vmem:[%s215] sm:$0xff]
        %s242 = sld [smem:[#allocation2]]
        %v243 = vstv %s242
        %v244 = vmul.f32 %v241, %v243
        %v245 = vmax.f32 %v244, 0.0
        %v246 = vmin.f32 %v245, 1.0
        %s247 = sld [smem:[#allocation3]]
        %v248 = vstv %s247
        %v249 = vmul.f32 %v246, %v248
        %v250 = vround.ne.pseudo %v249
        %s251 = sld [smem:[#allocation7]]
        %v252 = vstv %s251
        %v253 = vmul.f32 %v250, %v252
        %s254 = sld [smem:[#allocation3 + $0x1]]
        %v255 = vstv %s254
        %v256 = vmul.f32 %v246, %v255
        %v257 = vround.ne.pseudo %v256
        %s258 = sld [smem:[#allocation7 + $0x1]]
        %v259 = vstv %s258
        %v260 = vmul.f32 %v257, %v259
        %v261 = vadd.f32 %v253, %v260
        %s262 = sld [smem:[#allocation3 + $0x2]]
        %v263 = vstv %s262
        %v264 = vmul.f32 %v246, %v263
        %v265 = vround.ne.pseudo %v264
        %s266 = sld [smem:[#allocation7 + $0x2]]
        %v267 = vstv %s266
        %v268 = vmul.f32 %v265, %v267
        %v269 = vadd.f32 %v261, %v268
        %270 = vst [vmem:[%s240] sm:$0xff] %v269
        %s271 = sand.u32 %s121, 1
        %s272 = scalar_lea.sflag [#allocation5], %s271
        %s273 = sand.u32 %s121, 1
        %s274 = smul.addr %s273, 8
        %s275 = scalar_lea.vmem [#allocation10], %s274
        // Predicated region
        $region49: #{tpu_custom_call.1} parent=35 // pred_check
          %p276 = pneg %p131
        $region50: #{tpu_custom_call.1} parent=35 // pred_check_branch
          %278 = sbr.rel (%p276) target = $region52
        $region51: #{tpu_custom_call.1} parent=35 // pred_region
          %s280 = ssub.s32 128, 128
          %281 = vsyncadd %s272, %s280
          %s282 = smul.addr %s24, 128
          %s283 = scalar_lea.hbm %s4, %s282
          %s285 = sshll.u32 %s275, 4
          %s286 = int_to_ptr.vmem [resolvable:$true] %s285
          %288 = dma.vmem_to_hbm [thread:$0]  %s286, 128, %s283, %s272
        $region52: #{tpu_custom_call.1} parent=35 // pred_fallthru
          _
      $region36: #{tpu_custom_call.1} parent=5 // pred_fallthru
        _
      %p289 = scmp.le.s32.totalorder 2, %s19
      // Predicated region
      $region53: #{tpu_custom_call.1} parent=5 // pred_check
        %p290 = pneg %p289
      $region54: #{tpu_custom_call.1} parent=5 // pred_check_branch
        %292 = sbr.rel (%p290) target = $region56
      $region55: #{tpu_custom_call.1} parent=5 // pred_region
        %s293 = ssub.s32 %s19, 2
        // Predicated region
        $region57: #{tpu_custom_call.1} parent=55 // pred_check
          %p294 = pneg %p137
        $region58: #{tpu_custom_call.1} parent=55 // pred_check_branch
          %296 = sbr.rel (%p294) target = $region60
        $region59: #{tpu_custom_call.1} parent=55 // pred_region
          %s297 = sand.u32 %s122, 1
          %s298 = scalar_lea.sflag [#allocation5], %s297
          %s299 = sand.u32 %s122, 1
          %s300 = smul.addr %s299, 8
          %s301 = scalar_lea.vmem [#allocation10], %s300
          %302 = dma.done %s298, 128
        $region60: #{tpu_custom_call.1} parent=55 // pred_fallthru
          _
      $region56: #{tpu_custom_call.1} parent=5 // pred_fallthru
        _
    $region6: #{tpu_custom_call.1} parent=1 // loop_footer
      %s23 = sadd.s32 1, %s19
    $region7: #{tpu_custom_call.1} parent=1 // loop_footer_branch
      %18 = sbr.rel target = $region3
    $region8: #{tpu_custom_call.1} parent=1 // loop_exit
      _
    %303 = vsyncpa [#allocation4], 1
    %s304 = scalar_lea.sflag [#allocation4], 1
    %305 = vsyncpa %s304, 1
    %306 = vsyncpa [#allocation5], 1
    %s307 = scalar_lea.sflag [#allocation5], 1
    %308 = vsyncpa %s307, 1
    %309 = vsyncpa [#allocation6], 1
    %s310 = scalar_lea.sflag [#allocation6], 1
    %311 = vsyncpa %s310, 1
    %312 = vsyncpa [#allocation8], 1

</llo_original>
